<compile_context>
chip_gen: v6e
topology: v6e:2x2x1
jax: 0.10.0
libtpu: 0.0.40
codegen_flags: <defaults>
</compile_context>

<pallas_src>
import jax
import jax.numpy as jnp
from jax.experimental import pallas as pl
from jax.experimental.pallas import tpu as pltpu


HIDDEN_PAD = 128  # lane-width-aligned hidden size used inside the kernel


def _scene_disc_kernel(x1_ref, x2_ref, w1a_ref, w1b_ref, b1_ref,
                       w2_ref, b2_ref, w3_ref, b3_ref, o_ref):
    # Everything fits in VMEM in one shot: fc1 (concat fused) -> relu ->
    # fc2 -> relu -> fc3 (lane reduction) -> sigmoid.
    x1 = x1_ref[...]                                                     # (B, P)
    x2 = x2_ref[...]                                                     # (B, P)

    # fc1 with the concat folded in: [x1 | x2] @ W1 == x1 @ W1[:P] + x2 @ W1[P:]
    h1 = (jnp.dot(x1, w1a_ref[...], preferred_element_type=jnp.float32)
          + jnp.dot(x2, w1b_ref[...], preferred_element_type=jnp.float32)
          + b1_ref[...])                                                 # (B, 128)
    h1 = jnp.maximum(h1, 0.0)

    # fc2: single 128x128 MXU tile.
    h2 = jnp.dot(h1, w2_ref[...], preferred_element_type=jnp.float32) + b2_ref[...]
    h2 = jnp.maximum(h2, 0.0)                                            # (B, 128)

    # fc3: one output column -> cheaper as a lane reduction than an MXU matmul.
    z = jnp.sum(h2 * w3_ref[...], axis=-1, keepdims=True) + b3_ref[...]  # (B, 1)
    o_ref[...] = 1.0 / (1.0 + jnp.exp(-z))                               # sigmoid


def scene_discriminator_forward(pose_code1, pose_code2, packed):
    """Replicates SceneDiscriminator.forward.

    pose_code1/pose_code2: (B, poseDim, 1, 1) or (B, poseDim) float32.
    packed: output of pack_params() (padded, kernel-layout weights).
    Returns (B, 1) float32 in (0, 1).
    """
    p = packed["w1a"].shape[0]
    # torch.cat + view(-1, 2P) is equivalent to reshaping each code to (B, P)
    # and splitting W1 by rows; reshape here is metadata-only (no concat op).
    x1 = pose_code1.reshape(-1, p).astype(jnp.float32)
    x2 = pose_code2.reshape(-1, p).astype(jnp.float32)
    batch = x1.shape[0]

    vmem_specs = [pl.BlockSpec(memory_space=pltpu.MemorySpace.VMEM) for _ in range(9)]
    out = pl.pallas_call(
        _scene_disc_kernel,
        out_shape=jax.ShapeDtypeStruct((batch, 1), jnp.float32),
        in_specs=vmem_specs,
        out_specs=pl.BlockSpec(memory_space=pltpu.MemorySpace.VMEM),
    )(x1, x2, packed["w1a"], packed["w1b"], packed["b1"],
      packed["w2"], packed["b2"], packed["w3"], packed["b3"])
    return out


def init_params(key, pose_dim=5, hidden_unit=100):
    """Logical (unpadded) parameters, shapes matching nn.Linear(2P,H)/(H,H)/(H,1).
    Weights stored (in_features, out_features), biases as (1, out_features)."""
    k1, k2, k3, k4, k5, k6 = jax.random.split(key, 6)
    p2 = pose_dim * 2
    return {
        "w1": jax.random.normal(k1, (p2, hidden_unit), jnp.float32) * 0.02,
        "b1": jax.random.normal(k4, (1, hidden_unit), jnp.float32) * 0.02,
        "w2": jax.random.normal(k2, (hidden_unit, hidden_unit), jnp.float32) * 0.02,
        "b2": jax.random.normal(k5, (1, hidden_unit), jnp.float32) * 0.02,
        "w3": jax.random.normal(k3, (hidden_unit, 1), jnp.float32) * 0.02,
        "b3": jax.random.normal(k6, (1, 1), jnp.float32) * 0.02,
    }


def pack_params(params, hidden_pad=HIDDEN_PAD):
    """One-time repack for the kernel: pad hidden to 128 (zeros -> exact), split
    W1 into the two concat halves, and store W3 as a (1, 128) row for the
    lane-reduction fc3."""
    p2, h = params["w1"].shape
    p = p2 // 2
    pad_h = hidden_pad - h
    w1 = jnp.pad(params["w1"], ((0, 0), (0, pad_h)))
    return {
        "w1a": w1[:p],                                               # (P, 128)
        "w1b": w1[p:],                                               # (P, 128)
        "b1": jnp.pad(params["b1"], ((0, 0), (0, pad_h))),           # (1, 128)
        "w2": jnp.pad(params["w2"], ((0, pad_h), (0, pad_h))),       # (128, 128)
        "b2": jnp.pad(params["b2"], ((0, 0), (0, pad_h))),           # (1, 128)
        "w3": jnp.pad(params["w3"].T, ((0, 0), (0, pad_h))),         # (1, 128)
        "b3": params["b3"],                                          # (1, 1)
    }


def _reference_forward(pose_code1, pose_code2, params):
    # Pure-JAX reference mirroring the PyTorch forward exactly (unpadded params).
    b = pose_code1.shape[0]
    x = jnp.concatenate((pose_code1.reshape(b, -1), pose_code2.reshape(b, -1)), axis=1)
    x = x.reshape(-1, params["w1"].shape[0]).astype(jnp.float32)
    h1 = jnp.maximum(x @ params["w1"] + params["b1"], 0.0)
    h2 = jnp.maximum(h1 @ params["w2"] + params["b2"], 0.0)
    z = h2 @ params["w3"] + params["b3"]
    return 1.0 / (1.0 + jnp.exp(-z))


if __name__ == "__main__":
    key = jax.random.PRNGKey(0)
    k_p, k_a, k_b = jax.random.split(key, 3)

    pose_dim = 5
    hidden_unit = 100
    batch = 8

    params = init_params(k_p, pose_dim, hidden_unit)
    packed = pack_params(params)   # one-time repack; reuse across all forward calls

    # NCHW-style pose codes, (B, poseDim, 1, 1), like an encoder's pose output.
    pose_code1 = jax.random.normal(k_a, (batch, pose_dim, 1, 1), jnp.float32)
    pose_code2 = jax.random.normal(k_b, (batch, pose_dim, 1, 1), jnp.float32)

    out = scene_discriminator_forward(pose_code1, pose_code2, packed)
    out = jax.block_until_ready(out)

    ref = _reference_forward(pose_code1, pose_code2, params)
    assert out.shape == (batch, 1)
    assert jnp.allclose(out, ref, atol=1e-5, rtol=1e-5)

    print("KERNEL_OK")
</pallas_src>

<mosaic_0001>
module attributes {stable_mosaic.version = 11 : i64} {
  func.func @_scene_disc_kernel(%arg0: memref<8x5xf32, #tpu.memory_space<vmem>>, %arg1: memref<8x5xf32, #tpu.memory_space<vmem>>, %arg2: memref<5x128xf32, #tpu.memory_space<vmem>>, %arg3: memref<5x128xf32, #tpu.memory_space<vmem>>, %arg4: memref<1x128xf32, #tpu.memory_space<vmem>>, %arg5: memref<128x128xf32, #tpu.memory_space<vmem>>, %arg6: memref<1x128xf32, #tpu.memory_space<vmem>>, %arg7: memref<1x128xf32, #tpu.memory_space<vmem>>, %arg8: memref<1x1xf32, #tpu.memory_space<vmem>>, %arg9: memref<8x1xf32, #tpu.memory_space<vmem>>) attributes {dimension_semantics = [], scalar_prefetch = 0 : i64, scratch_operands = 0 : i64, tpu.core_type = #tpu.core_type<tc>} {
    %c0 = arith.constant 0 : index
    %c0_0 = arith.constant 0 : index
    %0 = vector.load %arg0[%c0, %c0_0] : memref<8x5xf32, #tpu.memory_space<vmem>>, vector<8x5xf32>
    %c0_1 = arith.constant 0 : index
    %c0_2 = arith.constant 0 : index
    %1 = vector.load %arg1[%c0_1, %c0_2] : memref<8x5xf32, #tpu.memory_space<vmem>>, vector<8x5xf32>
    %c0_3 = arith.constant 0 : index
    %c0_4 = arith.constant 0 : index
    %2 = vector.load %arg2[%c0_3, %c0_4] : memref<5x128xf32, #tpu.memory_space<vmem>>, vector<5x128xf32>
    %cst = arith.constant dense<0.000000e+00> : vector<8x128xf32>
    %3 = tpu.matmul %0, %2, %cst {dimension_numbers = #tpu.dot_dimension_numbers<[1], [0], [0], [1], [0, 0, 1, 1], [], []>} : vector<8x5xf32>, vector<5x128xf32>, vector<8x128xf32> -> vector<8x128xf32>
    %c0_5 = arith.constant 0 : index
    %c0_6 = arith.constant 0 : index
    %4 = vector.load %arg3[%c0_5, %c0_6] : memref<5x128xf32, #tpu.memory_space<vmem>>, vector<5x128xf32>
    %cst_7 = arith.constant dense<0.000000e+00> : vector<8x128xf32>
    %5 = tpu.matmul %1, %4, %cst_7 {dimension_numbers = #tpu.dot_dimension_numbers<[1], [0], [0], [1], [0, 0, 1, 1], [], []>} : vector<8x5xf32>, vector<5x128xf32>, vector<8x128xf32> -> vector<8x128xf32>
    %6 = arith.addf %3, %5 : vector<8x128xf32>
    %c0_8 = arith.constant 0 : index
    %c0_9 = arith.constant 0 : index
    %7 = vector.load %arg4[%c0_8, %c0_9] : memref<1x128xf32, #tpu.memory_space<vmem>>, vector<1x128xf32>
    %8 = vector.broadcast %7 : vector<1x128xf32> to vector<8x128xf32>
    %9 = arith.addf %6, %8 : vector<8x128xf32>
    %cst_10 = arith.constant 0.000000e+00 : f32
    %10 = vector.broadcast %cst_10 : f32 to vector<8x128xf32>
    %11 = arith.maximumf %9, %10 : vector<8x128xf32>
    %c0_11 = arith.constant 0 : index
    %c0_12 = arith.constant 0 : index
    %12 = vector.load %arg5[%c0_11, %c0_12] : memref<128x128xf32, #tpu.memory_space<vmem>>, vector<128x128xf32>
    %cst_13 = arith.constant dense<0.000000e+00> : vector<8x128xf32>
    %13 = tpu.matmul %11, %12, %cst_13 {dimension_numbers = #tpu.dot_dimension_numbers<[1], [0], [0], [1], [0, 0, 1, 1], [], []>} : vector<8x128xf32>, vector<128x128xf32>, vector<8x128xf32> -> vector<8x128xf32>
    %c0_14 = arith.constant 0 : index
    %c0_15 = arith.constant 0 : index
    %14 = vector.load %arg6[%c0_14, %c0_15] : memref<1x128xf32, #tpu.memory_space<vmem>>, vector<1x128xf32>
    %15 = vector.broadcast %14 : vector<1x128xf32> to vector<8x128xf32>
    %16 = arith.addf %13, %15 : vector<8x128xf32>
    %cst_16 = arith.constant 0.000000e+00 : f32
    %17 = vector.broadcast %cst_16 : f32 to vector<8x128xf32>
    %18 = arith.maximumf %16, %17 : vector<8x128xf32>
    %c0_17 = arith.constant 0 : index
    %c0_18 = arith.constant 0 : index
    %19 = vector.load %arg7[%c0_17, %c0_18] : memref<1x128xf32, #tpu.memory_space<vmem>>, vector<1x128xf32>
    %20 = vector.broadcast %19 : vector<1x128xf32> to vector<8x128xf32>
    %21 = arith.mulf %18, %20 : vector<8x128xf32>
    %cst_19 = arith.constant dense<0.000000e+00> : vector<8xf32>
    %22 = vector.multi_reduction <add>, %21, %cst_19 [1] : vector<8x128xf32> to vector<8xf32>
    %23 = vector.shape_cast %22 : vector<8xf32> to vector<8x1xf32>
    %c0_20 = arith.constant 0 : index
    %c0_21 = arith.constant 0 : index
    %24 = vector.load %arg8[%c0_20, %c0_21] : memref<1x1xf32, #tpu.memory_space<vmem>>, vector<1x1xf32>
    %25 = vector.broadcast %24 : vector<1x1xf32> to vector<8x1xf32>
    %26 = arith.addf %23, %25 : vector<8x1xf32>
    %cst_22 = arith.constant 0.000000e+00 : f32
    %27 = vector.broadcast %cst_22 : f32 to vector<8x1xf32>
    %28 = arith.subf %27, %26 : vector<8x1xf32>
    %29 = math.exp %28 : vector<8x1xf32>
    %cst_23 = arith.constant 1.000000e+00 : f32
    %30 = vector.broadcast %cst_23 : f32 to vector<8x1xf32>
    %31 = arith.addf %30, %29 : vector<8x1xf32>
    %cst_24 = arith.constant 1.000000e+00 : f32
    %32 = vector.broadcast %cst_24 : f32 to vector<8x1xf32>
    %33 = arith.divf %32, %31 : vector<8x1xf32>
    %c0_25 = arith.constant 0 : index
    %c0_26 = arith.constant 0 : index
    %34 = vector.load %arg9[%c0_25, %c0_26] : memref<8x1xf32, #tpu.memory_space<vmem>>, vector<8x1xf32>
    tpu.vector_store %arg9[%c0_25, %c0_26], %33 {strides = array<i32>} : memref<8x1xf32, #tpu.memory_space<vmem>>, vector<8x1xf32>,
    return
  }
}

</mosaic_0001>

<llo_original>
// kernel: tpu_custom_call.1
$region0: #{tpu_custom_call.1}
  #allocation0 [shape = 'u32[]', space=smem, size = 0x4, offset = 0x4, fixed_abs, tag = 'smem constant byte address 0x4 - core index']
  #allocation1 [shape = 'u32[144,128]{1,0:T(1,128)}', space=vmem, size = 0x12000, scoped, tag = 'internal scratch']
  #allocation2 [shape = 'f32[1,1]{1,0:T(1,128)S(1)}', space=vmem, size = 0x200, scoped, tag = 'scoped memory for tpu_custom_call.1']
  %s0 = inlined_call_operand.hbm [shape: f32[8,5], index: 0, kind: input, shape index: {}]
  %s1 = inlined_call_operand.hbm [shape: f32[8,5], index: 1, kind: input, shape index: {}]
  %s2 = inlined_call_operand.hbm [shape: f32[5,128], index: 2, kind: input, shape index: {}]
  %s3 = inlined_call_operand.hbm [shape: f32[5,128], index: 3, kind: input, shape index: {}]
  %s4 = inlined_call_operand.vmem [shape: f32[1,128], index: 4, kind: input, shape index: {}]
  %s5 = inlined_call_operand.hbm [shape: f32[128,128], index: 5, kind: input, shape index: {}]
  %s6 = inlined_call_operand.vmem [shape: f32[1,128], index: 6, kind: input, shape index: {}]
  %s7 = inlined_call_operand.vmem [shape: f32[1,128], index: 7, kind: input, shape index: {}]
  %s8 = inlined_call_operand.<no memory space> [shape: f32[1,1], index: 8, kind: input, shape index: {}]
  %s9 = inlined_call_operand.vmem [shape: f32[8,1], index: 9, kind: output, shape index: {}]
  %s10 = sld [smem:[#allocation0]]
  $region66: #{tpu_custom_call.1} parent=0
    _
  %s12 = ssub.s32 1, %s10
  %s13 = scalar_select 0, %s12, %s10
  %v14 = vstv %s8
  %15 = vst [vmem:[#allocation2] sm:$0x1] %v14
  $region1: #{tpu_custom_call.1} parent=0
    #allocation3 [shape = 'u8[4096]{0}', space=vmem, size = 0x1000, scoped, tag = 'input window, operand 0, single buffered']
    #allocation4 [shape = 's32[1]{0}', space=sflag, size = 0x4, scoped, tag = 'scoped memory for tpu_custom_call.1']
    #allocation5 [shape = 'u8[4096]{0}', space=vmem, size = 0x1000, scoped, tag = 'input window, operand 1, single buffered']
    #allocation6 [shape = 's32[1]{0}', space=sflag, size = 0x4, scoped, tag = 'scoped memory for tpu_custom_call.1']
    #allocation7 [shape = 'u8[4096]{0}', space=vmem, size = 0x1000, scoped, tag = 'input window, operand 2, single buffered']
    #allocation8 [shape = 'u8[4096]{0}', space=vmem, size = 0x1000, scoped, tag = 'input window, operand 3, single buffered']
    #allocation9 [shape = 's32[1]{0}', space=sflag, size = 0x4, scoped, tag = 'scoped memory for tpu_custom_call.1']
    #allocation10 [shape = 'u8[65536]{0}', space=vmem, size = 0x10000, scoped, tag = 'input window, operand 5, single buffered']
    %16 = vsyncpa [#allocation4], 0
    %17 = vsyncpa [#allocation6], 0
    %18 = vsyncpa [#allocation9], 0
    // Predicated region
    $region2: #{tpu_custom_call.1} parent=1 // pred_check
      _
    $region3: #{tpu_custom_call.1} parent=1 // pred_check_branch
      %20 = sbr.rel (0) target = $region5
    $region4: #{tpu_custom_call.1} parent=1 // pred_region
      %s22 = ssub.s32 128, 128
      %23 = vsyncadd [#allocation4], %s22
      %s25 = sshll.u32 [#allocation3], 4
      %s26 = int_to_ptr.vmem [resolvable:$true] %s25
      %28 = dma.hbm_to_vmem [thread:$0]  %s0, 128, %s26, [#allocation4]
    $region5: #{tpu_custom_call.1} parent=1 // pred_fallthru
      _
    // Predicated region
    $region6: #{tpu_custom_call.1} parent=1 // pred_check
      _
    $region7: #{tpu_custom_call.1} parent=1 // pred_check_branch
      %30 = sbr.rel (0) target = $region9
    $region8: #{tpu_custom_call.1} parent=1 // pred_region
      %s32 = ssub.s32 128, 128
      %33 = vsyncadd [#allocation6], %s32
      %s35 = sshll.u32 [#allocation5], 4
      %s36 = int_to_ptr.vmem [resolvable:$true] %s35
      %38 = dma.hbm_to_vmem [thread:$0]  %s1, 128, %s36, [#allocation6]
    $region9: #{tpu_custom_call.1} parent=1 // pred_fallthru
      _
    // Predicated region
    $region10: #{tpu_custom_call.1} parent=1 // pred_check
      _
    $region11: #{tpu_custom_call.1} parent=1 // pred_check_branch
      %40 = sbr.rel (0) target = $region13
    $region12: #{tpu_custom_call.1} parent=1 // pred_region
      %s42 = ssub.s32 128, 128
      %43 = vsyncadd [#allocation6], %s42
      %s45 = sshll.u32 [#allocation7], 4
      %s46 = int_to_ptr.vmem [resolvable:$true] %s45
      %48 = dma.hbm_to_vmem [thread:$0]  %s2, 128, %s46, [#allocation6]
    $region13: #{tpu_custom_call.1} parent=1 // pred_fallthru
      _
    // Predicated region
    $region14: #{tpu_custom_call.1} parent=1 // pred_check
      _
    $region15: #{tpu_custom_call.1} parent=1 // pred_check_branch
      %50 = sbr.rel (0) target = $region17
    $region16: #{tpu_custom_call.1} parent=1 // pred_region
      %s52 = ssub.s32 128, 128
      %53 = vsyncadd [#allocation9], %s52
      %s55 = sshll.u32 [#allocation8], 4
      %s56 = int_to_ptr.vmem [resolvable:$true] %s55
      %58 = dma.hbm_to_vmem [thread:$0]  %s3, 128, %s56, [#allocation9]
    $region17: #{tpu_custom_call.1} parent=1 // pred_fallthru
      _
    // Predicated region
    $region18: #{tpu_custom_call.1} parent=1 // pred_check
      _
    $region19: #{tpu_custom_call.1} parent=1 // pred_check_branch
      %60 = sbr.rel (0) target = $region21
    $region20: #{tpu_custom_call.1} parent=1 // pred_region
      _
    $region21: #{tpu_custom_call.1} parent=1 // pred_fallthru
      _
    // Predicated region
    $region22: #{tpu_custom_call.1} parent=1 // pred_check
      _
    $region23: #{tpu_custom_call.1} parent=1 // pred_check_branch
      %62 = sbr.rel (0) target = $region25
    $region24: #{tpu_custom_call.1} parent=1 // pred_region
      %s64 = ssub.s32 2048, 2048
      %65 = vsyncadd [#allocation9], %s64
      %s66 = sshll.u32 [#allocation10], 4
      %s67 = int_to_ptr.vmem [resolvable:$true] %s66
      %72 = dma.hbm_to_vmem [thread:$0]  %s5, 2048, %s67, [#allocation9], 128, 128, 8
    $region25: #{tpu_custom_call.1} parent=1 // pred_fallthru
      _
    // Predicated region
    $region26: #{tpu_custom_call.1} parent=1 // pred_check
      _
    $region27: #{tpu_custom_call.1} parent=1 // pred_check_branch
      %74 = sbr.rel (0) target = $region29
    $region28: #{tpu_custom_call.1} parent=1 // pred_region
      _
    $region29: #{tpu_custom_call.1} parent=1 // pred_fallthru
      _
    // Predicated region
    $region30: #{tpu_custom_call.1} parent=1 // pred_check
      _
    $region31: #{tpu_custom_call.1} parent=1 // pred_check_branch
      %76 = sbr.rel (0) target = $region33
    $region32: #{tpu_custom_call.1} parent=1 // pred_region
      _
    $region33: #{tpu_custom_call.1} parent=1 // pred_fallthru
      _
    // Predicated region
    $region34: #{tpu_custom_call.1} parent=1 // pred_check
      _
    $region35: #{tpu_custom_call.1} parent=1 // pred_check_branch
      %78 = sbr.rel (0) target = $region37
    $region36: #{tpu_custom_call.1} parent=1 // pred_region
      _
    $region37: #{tpu_custom_call.1} parent=1 // pred_fallthru
      _
    // Predicated region
    $region38: #{tpu_custom_call.1} parent=1 // pred_check
      _
    $region39: #{tpu_custom_call.1} parent=1 // pred_check_branch
      %80 = sbr.rel (0) target = $region41
    $region40: #{tpu_custom_call.1} parent=1 // pred_region
      %81 = dma.done [#allocation4], 128
    $region41: #{tpu_custom_call.1} parent=1 // pred_fallthru
      _
    // Predicated region
    $region42: #{tpu_custom_call.1} parent=1 // pred_check
      _
    $region43: #{tpu_custom_call.1} parent=1 // pred_check_branch
      %83 = sbr.rel (0) target = $region45
    $region44: #{tpu_custom_call.1} parent=1 // pred_region
      %84 = dma.done [#allocation6], 128
    $region45: #{tpu_custom_call.1} parent=1 // pred_fallthru
      _
    // Predicated region
    $region46: #{tpu_custom_call.1} parent=1 // pred_check
      _
    $region47: #{tpu_custom_call.1} parent=1 // pred_check_branch
      %86 = sbr.rel (0) target = $region49
    $region48: #{tpu_custom_call.1} parent=1 // pred_region
      %87 = dma.done [#allocation6], 128
    $region49: #{tpu_custom_call.1} parent=1 // pred_fallthru
      _
    // Predicated region
    $region50: #{tpu_custom_call.1} parent=1 // pred_check
      _
    $region51: #{tpu_custom_call.1} parent=1 // pred_check_branch
      %89 = sbr.rel (0) target = $region53
    $region52: #{tpu_custom_call.1} parent=1 // pred_region
      %90 = dma.done [#allocation9], 128
    $region53: #{tpu_custom_call.1} parent=1 // pred_fallthru
      _
    // Predicated region
    $region54: #{tpu_custom_call.1} parent=1 // pred_check
      _
    $region55: #{tpu_custom_call.1} parent=1 // pred_check_branch
      %92 = sbr.rel (0) target = $region57
    $region56: #{tpu_custom_call.1} parent=1 // pred_region
      %93 = dma.done [#allocation9], 2048
    $region57: #{tpu_custom_call.1} parent=1 // pred_fallthru
      _
    %v94 = vld [vmem:[#allocation3] sm:$0xff]
    %v95 = vld [vmem:[#allocation5] sm:$0xff]
    %v96 = vld [vmem:[#allocation7] sm:$0x1f]
    %v97 = vld [vmem:[#allocation8] sm:$0x1f]
    %vm98 = vcmask 39936
    %v100 = vsel %vm98, %v95, 0
    %vm102 = vcmask 1044480
    %v104 = vsel %vm102, %v97, 0
    %106 = vmatprep.subr.mxu0 0.0
    %107 = vmatpush1.msra.mxu0 0.0
    %108 = vmatprep.subr.mxu0 0.0
    %109 = vmatpush1.msra.mxu0 0.0
    %110 = vmatprep.subr.mxu0 0.0
    %111 = vmatpush1.msra.mxu0 0.0
    %112 = vmatprep.subr.mxu0 0.0
    %113 = vmatpush1.msra.mxu0 0.0
    %114 = vmatprep.subr.mxu0 0.0
    %115 = vmatpush1.msra.mxu0 0.0
    %116 = vmatprep.subr.mxu0 0.0
    %117 = vmatpush1.msra.mxu0 0.0
    %118 = vmatprep.subr.mxu0 0.0
    %119 = vmatpush1.msra.mxu0 0.0
    %120 = vmatprep.subr.mxu0 0.0
    %121 = vmatpush1.msra.mxu0 0.0
    %122 = vmatprep.subr.mxu0 0.0
    %123 = vmatpush1.msra.mxu0 0.0
    %124 = vmatprep.subr.mxu0 0.0
    %125 = vmatpush1.msra.mxu0 0.0
    %126 = vmatprep.subr.mxu0 0.0
    %127 = vmatpush1.msra.mxu0 0.0
    %128 = vmatprep.subr.mxu0 0.0
    %129 = vmatpush1.msra.mxu0 0.0
    %130 = vmatprep.subr.mxu0 0.0
    %131 = vmatpush1.msra.mxu0 0.0
    %132 = vmatprep.subr.mxu0 0.0
    %133 = vmatpush1.msra.mxu0 0.0
    %134 = vmatprep.subr.mxu0 0.0
    %135 = vmatpush1.msra.mxu0 0.0
    %136 = vmatprep.subr.mxu0 0.0
    %137 = vmatpush1.msra.mxu0 %v104
    %138 = vmatprep.subr.mxu0 0.0
    %139 = vmatpush2.msra.mxu0 0.0
    %140 = vmatprep.subr.mxu0 0.0
    %141 = vmatpush2.msra.mxu0 0.0
    %142 = vmatprep.subr.mxu0 0.0
    %143 = vmatpush2.msra.mxu0 0.0
    %144 = vmatprep.subr.mxu0 0.0
    %145 = vmatpush2.msra.mxu0 0.0
    %146 = vmatprep.subr.mxu0 0.0
    %147 = vmatpush2.msra.mxu0 0.0
    %148 = vmatprep.subr.mxu0 0.0
    %149 = vmatpush2.msra.mxu0 0.0
    %150 = vmatprep.subr.mxu0 0.0
    %151 = vmatpush2.msra.mxu0 0.0
    %152 = vmatprep.subr.mxu0 0.0
    %153 = vmatpush2.msra.mxu0 0.0
    %154 = vmatprep.subr.mxu0 0.0
    %155 = vmatpush2.msra.mxu0 0.0
    %156 = vmatprep.subr.mxu0 0.0
    %157 = vmatpush2.msra.mxu0 0.0
    %158 = vmatprep.subr.mxu0 0.0
    %159 = vmatpush2.msra.mxu0 0.0
    %160 = vmatprep.subr.mxu0 0.0
    %161 = vmatpush2.msra.mxu0 0.0
    %162 = vmatprep.subr.mxu0 0.0
    %163 = vmatpush2.msra.mxu0 0.0
    %164 = vmatprep.subr.mxu0 0.0
    %165 = vmatpush2.msra.mxu0 0.0
    %166 = vmatprep.subr.mxu0 0.0
    %167 = vmatpush2.msra.mxu0 0.0
    %168 = vmatprep.subr.mxu0 0.0
    %169 = vmatpush2.msra.mxu0 0.0
    %170 = vmatprep.mubr.f32.mxu0 0.0
    %171 = vmatmul.mubr.f32.gmra.mxu0 %v100
    %v172 = vpop.f32.mrf.mxu0
    %v173 = vadd.f32 0.0, %v172
    %v174 = vpop.f32.mrf.mxu0
    %175 = vdwg.mxu0
    %v177 = vsel %vm98, %v94, 0
    %v180 = vsel %vm102, %v96, 0
    %182 = vmatprep.subr.mxu0 0.0
    %183 = vmatpush1.msra.mxu0 0.0
    %184 = vmatprep.subr.mxu0 0.0
    %185 = vmatpush1.msra.mxu0 0.0
    %186 = vmatprep.subr.mxu0 0.0
    %187 = vmatpush1.msra.mxu0 0.0
    %188 = vmatprep.subr.mxu0 0.0
    %189 = vmatpush1.msra.mxu0 0.0
    %190 = vmatprep.subr.mxu0 0.0
    %191 = vmatpush1.msra.mxu0 0.0
    %192 = vmatprep.subr.mxu0 0.0
    %193 = vmatpush1.msra.mxu0 0.0
    %194 = vmatprep.subr.mxu0 0.0
    %195 = vmatpush1.msra.mxu0 0.0
    %196 = vmatprep.subr.mxu0 0.0
    %197 = vmatpush1.msra.mxu0 0.0
    %198 = vmatprep.subr.mxu0 0.0
    %199 = vmatpush1.msra.mxu0 0.0
    %200 = vmatprep.subr.mxu0 0.0
    %201 = vmatpush1.msra.mxu0 0.0
    %202 = vmatprep.subr.mxu0 0.0
    %203 = vmatpush1.msra.mxu0 0.0
    %204 = vmatprep.subr.mxu0 0.0
    %205 = vmatpush1.msra.mxu0 0.0
    %206 = vmatprep.subr.mxu0 0.0
    %207 = vmatpush1.msra.mxu0 0.0
    %208 = vmatprep.subr.mxu0 0.0
    %209 = vmatpush1.msra.mxu0 0.0
    %210 = vmatprep.subr.mxu0 0.0
    %211 = vmatpush1.msra.mxu0 0.0
    %212 = vmatprep.subr.mxu0 0.0
    %213 = vmatpush1.msra.mxu0 %v180
    %214 = vmatprep.subr.mxu0 0.0
    %215 = vmatpush2.msra.mxu0 0.0
    %216 = vmatprep.subr.mxu0 0.0
    %217 = vmatpush2.msra.mxu0 0.0
    %218 = vmatprep.subr.mxu0 0.0
    %219 = vmatpush2.msra.mxu0 0.0
    %220 = vmatprep.subr.mxu0 0.0
    %221 = vmatpush2.msra.mxu0 0.0
    %222 = vmatprep.subr.mxu0 0.0
    %223 = vmatpush2.msra.mxu0 0.0
    %224 = vmatprep.subr.mxu0 0.0
    %225 = vmatpush2.msra.mxu0 0.0
    %226 = vmatprep.subr.mxu0 0.0
    %227 = vmatpush2.msra.mxu0 0.0
    %228 = vmatprep.subr.mxu0 0.0
    %229 = vmatpush2.msra.mxu0 0.0
    %230 = vmatprep.subr.mxu0 0.0
    %231 = vmatpush2.msra.mxu0 0.0
    %232 = vmatprep.subr.mxu0 0.0
    %233 = vmatpush2.msra.mxu0 0.0
    %234 = vmatprep.subr.mxu0 0.0
    %235 = vmatpush2.msra.mxu0 0.0
    %236 = vmatprep.subr.mxu0 0.0
    %237 = vmatpush2.msra.mxu0 0.0
    %238 = vmatprep.subr.mxu0 0.0
    %239 = vmatpush2.msra.mxu0 0.0
    %240 = vmatprep.subr.mxu0 0.0
    %241 = vmatpush2.msra.mxu0 0.0
    %242 = vmatprep.subr.mxu0 0.0
    %243 = vmatpush2.msra.mxu0 0.0
    %244 = vmatprep.subr.mxu0 0.0
    %245 = vmatpush2.msra.mxu0 0.0
    %246 = vmatprep.mubr.f32.mxu0 0.0
    %247 = vmatmul.mubr.f32.gmra.mxu0 %v177
    %v248 = vpop.f32.mrf.mxu0
    %v249 = vadd.f32 %v173, %v248
    %v250 = vpop.f32.mrf.mxu0
    %251 = vdwg.mxu0
    %v252 = vld [vmem:[%s4] sm:$0x1]
    %v254 = vlaneseq
    %v255 = vshrl.u32 %v254, 7
    %v256 = vsub.s32 0, %v255
    %v257 = vrot.slane %v252, %v256
    %v259 = vadd.f32 %v249, %v257
    %v260 = vmax.f32 %v259, 0.0
    %v261 = vld [vmem:[#allocation10] sm:$0xff]
    %v262 = vld [vmem:[#allocation10 + $0x8] sm:$0xff]
    %v263 = vld [vmem:[#allocation10 + $0x10] sm:$0xff]
    %v264 = vld [vmem:[#allocation10 + $0x18] sm:$0xff]
    %v265 = vld [vmem:[#allocation10 + $0x20] sm:$0xff]
    %v266 = vld [vmem:[#allocation10 + $0x28] sm:$0xff]
    %v267 = vld [vmem:[#allocation10 + $0x30] sm:$0xff]
    %v268 = vld [vmem:[#allocation10 + $0x38] sm:$0xff]
    %v269 = vld [vmem:[#allocation10 + $0x40] sm:$0xff]
    %v270 = vld [vmem:[#allocation10 + $0x48] sm:$0xff]
    %v271 = vld [vmem:[#allocation10 + $0x50] sm:$0xff]
    %v272 = vld [vmem:[#allocation10 + $0x58] sm:$0xff]
    %v273 = vld [vmem:[#allocation10 + $0x60] sm:$0xff]
    %v274 = vld [vmem:[#allocation10 + $0x68] sm:$0xff]
    %v275 = vld [vmem:[#allocation10 + $0x70] sm:$0xff]
    %v276 = vld [vmem:[#allocation10 + $0x78] sm:$0xff]
    %v277 = vld [vmem:[%s6] sm:$0x1]
    %v279 = vlaneseq
    %v280 = vshrl.u32 %v279, 7
    %v281 = vsub.s32 0, %v280
    %v282 = vrot.slane %v277, %v281
    %284 = vmatprep.subr.mxu0 0.0
    %285 = vmatpush1.msra.mxu0 %v276
    %286 = vmatprep.subr.mxu0 0.0
    %287 = vmatpush1.msra.mxu0 %v275
    %288 = vmatprep.subr.mxu0 0.0
    %289 = vmatpush1.msra.mxu0 %v274
    %290 = vmatprep.subr.mxu0 0.0
    %291 = vmatpush1.msra.mxu0 %v273
    %292 = vmatprep.subr.mxu0 0.0
    %293 = vmatpush1.msra.mxu0 %v272
    %294 = vmatprep.subr.mxu0 0.0
    %295 = vmatpush1.msra.mxu0 %v271
    %296 = vmatprep.subr.mxu0 0.0
    %297 = vmatpush1.msra.mxu0 %v270
    %298 = vmatprep.subr.mxu0 0.0
    %299 = vmatpush1.msra.mxu0 %v269
    %300 = vmatprep.subr.mxu0 0.0
    %301 = vmatpush1.msra.mxu0 %v268
    %302 = vmatprep.subr.mxu0 0.0
    %303 = vmatpush1.msra.mxu0 %v267
    %304 = vmatprep.subr.mxu0 0.0
    %305 = vmatpush1.msra.mxu0 %v266
    %306 = vmatprep.subr.mxu0 0.0
    %307 = vmatpush1.msra.mxu0 %v265
    %308 = vmatprep.subr.mxu0 0.0
    %309 = vmatpush1.msra.mxu0 %v264
    %310 = vmatprep.subr.mxu0 0.0
    %311 = vmatpush1.msra.mxu0 %v263
    %312 = vmatprep.subr.mxu0 0.0
    %313 = vmatpush1.msra.mxu0 %v262
    %314 = vmatprep.subr.mxu0 0.0
    %315 = vmatpush1.msra.mxu0 %v261
    %316 = vmatprep.subr.mxu0 0.0
    %317 = vmatpush2.msra.mxu0 0.0
    %318 = vmatprep.subr.mxu0 0.0
    %319 = vmatpush2.msra.mxu0 0.0
    %320 = vmatprep.subr.mxu0 0.0
    %321 = vmatpush2.msra.mxu0 0.0
    %322 = vmatprep.subr.mxu0 0.0
    %323 = vmatpush2.msra.mxu0 0.0
    %324 = vmatprep.subr.mxu0 0.0
    %325 = vmatpush2.msra.mxu0 0.0
    %326 = vmatprep.subr.mxu0 0.0
    %327 = vmatpush2.msra.mxu0 0.0
    %328 = vmatprep.subr.mxu0 0.0
    %329 = vmatpush2.msra.mxu0 0.0
    %330 = vmatprep.subr.mxu0 0.0
    %331 = vmatpush2.msra.mxu0 0.0
    %332 = vmatprep.subr.mxu0 0.0
    %333 = vmatpush2.msra.mxu0 0.0
    %334 = vmatprep.subr.mxu0 0.0
    %335 = vmatpush2.msra.mxu0 0.0
    %336 = vmatprep.subr.mxu0 0.0
    %337 = vmatpush2.msra.mxu0 0.0
    %338 = vmatprep.subr.mxu0 0.0
    %339 = vmatpush2.msra.mxu0 0.0
    %340 = vmatprep.subr.mxu0 0.0
    %341 = vmatpush2.msra.mxu0 0.0
    %342 = vmatprep.subr.mxu0 0.0
    %343 = vmatpush2.msra.mxu0 0.0
    %344 = vmatprep.subr.mxu0 0.0
    %345 = vmatpush2.msra.mxu0 0.0
    %346 = vmatprep.subr.mxu0 0.0
    %347 = vmatpush2.msra.mxu0 0.0
    %348 = vmatprep.mubr.f32.mxu0 0.0
    %349 = vmatmul.mubr.f32.gmra.mxu0 %v260
    %v350 = vpop.f32.mrf.mxu0
    %v351 = vadd.f32 %v282, %v350
    %v352 = vpop.f32.mrf.mxu0
    %353 = vdwg.mxu0
    %v354 = vmax.f32 %v351, 0.0
    %v355 = vld [vmem:[%s7] sm:$0x1]
    %v357 = vlaneseq
    %v358 = vshrl.u32 %v357, 7
    %v359 = vsub.s32 0, %v358
    %v360 = vrot.slane %v355, %v359
    %v362 = vmul.f32 %v354, %v360
    %363 = vadd.xlane.f32.xlu0 %v362
    %v364 = vpop.xlane.xlu0 %363
    %v365 = vld [vmem:[#allocation2] sm:$0x1]
    %v367 = vlaneseq
    %v368 = vshrl.u32 %v367, 7
    %v369 = vsub.s32 0, %v368
    %v370 = vrot.slane %v365, %v369
    %v372 = vadd.f32 %v364, %v370
    %v373 = vsub.f32 0.0, %v372
    %v374 = vmul.f32 %v373, 1.442695
    %v375 = vpow.pop %v374
    %v376 = vadd.f32 %v375, 1.0
    %v377 = vrcp.pop %v376
    %v378 = vmul.f32 1.0, %v377
    %vm379 = vcmask 7168
    %380 = vst.msk [vmem:[%s9] sm:$0xff] %vm379, %v378
    // Predicated region
    $region58: #{tpu_custom_call.1} parent=1 // pred_check
      _
    $region59: #{tpu_custom_call.1} parent=1 // pred_check_branch
      %382 = sbr.rel (0) target = $region61
    $region60: #{tpu_custom_call.1} parent=1 // pred_region
      _
    $region61: #{tpu_custom_call.1} parent=1 // pred_fallthru
      _
    // Predicated region
    $region62: #{tpu_custom_call.1} parent=1 // pred_check
      _
    $region63: #{tpu_custom_call.1} parent=1 // pred_check_branch
      %384 = sbr.rel (0) target = $region65
    $region64: #{tpu_custom_call.1} parent=1 // pred_region
      _
    $region65: #{tpu_custom_call.1} parent=1 // pred_fallthru
      _
    %385 = vsyncpa [#allocation4], 1
    %386 = vsyncpa [#allocation6], 1
    %387 = vsyncpa [#allocation9], 1

</llo_original>
